<compile_context>
chip_gen: v6e
topology: v6e:2x2x1
jax: 0.10.0
libtpu: 0.0.40
codegen_flags: <defaults>
</compile_context>

<pallas_src>
import functools

import jax
import jax.numpy as jnp
from jax.experimental import pallas as pl
from jax.experimental.pallas import tpu as pltpu


def _round_up(x, m):
    return (x + m - 1) // m * m


def _decoder_kernel(z_ref, w1_ref, b1_ref, w2_ref, b2_ref, y_ref, h_ref):
    # ---- fc1 + tanh, only when the batch tile changes (first Dp chunk).
    @pl.when(pl.program_id(1) == 0)
    def _():
        z = z_ref[...]                                  # (blk, z_dim) f32
        w1 = w1_ref[...]                                # (z_dim, Hp)  f32
        # K = z_dim is tiny -> VPU broadcast-FMA instead of an MXU matmul.
        acc = z[:, 0:1] * w1[0:1, :] + b1_ref[...]      # (blk, Hp) f32
        for k in range(1, z.shape[1]):                  # static unroll, z_dim == 2
            acc = acc + z[:, k:k + 1] * w1[k:k + 1, :]
        # Store h in the matmul dtype so every Dp chunk feeds the MXU directly.
        h_ref[...] = jnp.tanh(acc).astype(h_ref.dtype)

    # Dropout is identity in eval mode.
    # TODO(synk): training-mode dropout would draw a mask via pltpu.prng_seed +
    # pltpu.prng_random_bits here.

    # ---- fc2 chunk + sigmoid (MXU matmul, bf16 operands, f32 accumulate).
    logits = (
        jnp.dot(h_ref[...], w2_ref[...], preferred_element_type=jnp.float32)
        + b2_ref[...]
    )
    # sigmoid(x) == 0.5*tanh(0.5*x) + 0.5  -> a single EUP op per element.
    y_ref[...] = (0.5 * jnp.tanh(0.5 * logits) + 0.5).astype(y_ref.dtype)


def prepare_decoder_params(w1, b1, w2, b2, *, tn=256, matmul_dtype=jnp.bfloat16):
    """One-time (model-load) padding / casting of the constant parameters.

    Keeps the ~1 MB pad/cast HLOs off the per-call forward path.  Feature dims
    are padded to lane-dense multiples (H -> 128, D -> tn) with zero fill, so
    padded h columns are tanh(0)=0 and the matching w2 rows are zero -> padding
    never leaks into real outputs.
    """
    zdim, H = w1.shape
    D = w2.shape[1]

    Hp = _round_up(H, 128)
    Dp128 = _round_up(D, 128)
    tn = int(tn)
    if Dp128 <= tn:        # small D: a single lane-dense chunk
        tn = Dp128
    Dp = _round_up(D, tn)

    w1p = jnp.pad(jnp.asarray(w1, jnp.float32), ((0, 0), (0, Hp - H)))
    b1p = jnp.pad(jnp.asarray(b1, jnp.float32).reshape(1, -1),
                  ((0, 0), (0, Hp - H)))
    # Only the large fc2 weight goes through the MXU -> cast it (DMA + MXU win).
    # TODO(synk): on v7x an fp8 matmul_dtype is possible; kept bf16 for v5e/v6e.
    w2p = jnp.pad(jnp.asarray(w2, jnp.float32),
                  ((0, Hp - H), (0, Dp - D))).astype(matmul_dtype)
    b2p = jnp.pad(jnp.asarray(b2, jnp.float32).reshape(1, -1),
                  ((0, 0), (0, Dp - D)))

    meta = {"z_dim": zdim, "H": H, "D": D, "Hp": Hp, "Dp": Dp, "tn": tn}
    return (w1p, b1p, w2p, b2p), meta


@functools.partial(jax.jit,
                   static_argnames=("d_out", "tn", "block_b", "out_dtype"))
def bernoulli_decoder_forward(z, w1p, b1p, w2p, b2p, *, d_out, tn,
                              block_b=512, out_dtype=jnp.float32):
    """Fast path: takes pre-padded params from prepare_decoder_params."""
    B, zdim = z.shape
    Hp = w1p.shape[1]
    Dp = w2p.shape[1]
    assert Dp % tn == 0 and Hp % 128 == 0

    # Batch tiling: block of rows, multiple of 8 sublanes.
    Bp8 = _round_up(B, 8)
    blk = min(block_b, Bp8)
    # v7x: give the 'parallel' batch axis >=2 steps once the batch is large
    # enough that compute/writeback (not the one-time w2 fetch) dominates.
    # Small batches keep one step so w1/b1/w2 are only DMA'd once (v5e/v6e).
    if Bp8 >= 512:
        blk = min(blk, _round_up((Bp8 + 1) // 2, 8))
    Bp = _round_up(B, blk)

    zp = jnp.pad(z.astype(jnp.float32), ((0, Bp - B), (0, 0)))

    out_itemsize = jnp.dtype(out_dtype).itemsize
    w2_itemsize = jnp.dtype(w2p.dtype).itemsize
    cost = pl.CostEstimate(
        flops=2 * Bp * (zdim * Hp + Hp * Dp),
        transcendentals=Bp * (Hp + Dp),
        bytes_accessed=(zp.size * 4 + w1p.size * 4 + b1p.size * 4
                        + (Bp // blk) * w2p.size * w2_itemsize
                        + b2p.size * 4 + Bp * Dp * out_itemsize),
    )

    yp = pl.pallas_call(
        _decoder_kernel,
        out_shape=jax.ShapeDtypeStruct((Bp, Dp), out_dtype),
        grid_spec=pltpu.PrefetchScalarGridSpec(
            num_scalar_prefetch=0,
            grid=(Bp // blk, Dp // tn),
            in_specs=[
                pl.BlockSpec((blk, zdim), lambda i, j: (i, 0)),   # z: batch-tiled
                pl.BlockSpec((zdim, Hp), lambda i, j: (0, 0)),    # w1: resident
                pl.BlockSpec((1, Hp), lambda i, j: (0, 0)),       # b1: resident
                pl.BlockSpec((Hp, tn), lambda i, j: (0, j)),      # w2: streamed
                pl.BlockSpec((1, tn), lambda i, j: (0, j)),       # b2: streamed
            ],
            out_specs=pl.BlockSpec((blk, tn), lambda i, j: (i, j)),
            scratch_shapes=[pltpu.VMEM((blk, Hp), w2p.dtype)],    # h, reused over j
        ),
        compiler_params=pltpu.CompilerParams(
            dimension_semantics=("parallel", "arbitrary"),
        ),
        cost_estimate=cost,
    )(zp, w1p, b1p, w2p, b2p)

    return yp[:B, :d_out]


def bernoulli_decoder(z, w1, b1, w2, b2, *, block_b=512, tn=256,
                      matmul_dtype=jnp.bfloat16, out_dtype=jnp.float32):
    """Convenience one-shot wrapper (prep + forward).  For repeated calls,
    hoist prepare_decoder_params() out and call bernoulli_decoder_forward."""
    (w1p, b1p, w2p, b2p), meta = prepare_decoder_params(
        w1, b1, w2, b2, tn=tn, matmul_dtype=matmul_dtype)
    return bernoulli_decoder_forward(
        z, w1p, b1p, w2p, b2p, d_out=meta["D"], tn=meta["tn"],
        block_b=block_b, out_dtype=out_dtype)


def reference(z, w1, b1, w2, b2, matmul_dtype=jnp.float32):
    h = jnp.tanh(jnp.dot(z, w1, precision=jax.lax.Precision.HIGHEST) + b1)
    logits = jnp.dot(h.astype(matmul_dtype), w2.astype(matmul_dtype),
                     preferred_element_type=jnp.float32) + b2
    return jax.nn.sigmoid(logits)


if __name__ == "__main__":
    # Shapes consistent with the module: z_dim=2, hidden_dim=300 (module
    # globals), output_dim=784 (MNIST decoder); small eval batch.
    batch, z_dim, hidden_dim, output_dim = 32, 2, 300, 784

    key = jax.random.PRNGKey(0)
    k_z, k_w1, k_b1, k_w2, k_b2 = jax.random.split(key, 5)

    z = jax.random.normal(k_z, (batch, z_dim), dtype=jnp.float32)
    # Deterministic parameter init (PyTorch Linear default-ish uniform scale).
    s1 = 1.0 / jnp.sqrt(z_dim)
    s2 = 1.0 / jnp.sqrt(hidden_dim)
    w1 = jax.random.uniform(k_w1, (z_dim, hidden_dim), jnp.float32, -s1, s1)
    b1 = jax.random.uniform(k_b1, (1, hidden_dim), jnp.float32, -s1, s1)
    w2 = jax.random.uniform(k_w2, (hidden_dim, output_dim), jnp.float32, -s2, s2)
    b2 = jax.random.uniform(k_b2, (1, output_dim), jnp.float32, -s2, s2)

    # Model-load-time prep (hoisted out of the per-call path), then forward.
    (w1p, b1p, w2p, b2p), meta = prepare_decoder_params(w1, b1, w2, b2)
    w1p, b1p, w2p, b2p = jax.block_until_ready((w1p, b1p, w2p, b2p))

    y = bernoulli_decoder_forward(z, w1p, b1p, w2p, b2p,
                                  d_out=meta["D"], tn=meta["tn"])
    y = jax.block_until_ready(y)
    assert y.shape == (batch, output_dim)

    # Tight check against a reference using the same bf16 matmul operands.
    y_ref_bf16 = reference(z, w1, b1, w2, b2, matmul_dtype=jnp.bfloat16)
    assert jnp.allclose(y, y_ref_bf16, atol=5e-3, rtol=0), (
        float(jnp.max(jnp.abs(y - y_ref_bf16))))
    # Loose check against the pure-f32 PyTorch-equivalent forward.
    y_ref_f32 = reference(z, w1, b1, w2, b2)
    assert jnp.allclose(y, y_ref_f32, atol=2e-2, rtol=0), (
        float(jnp.max(jnp.abs(y - y_ref_f32))))

    # One-shot convenience wrapper still works (and bf16-output option).
    y2 = jax.block_until_ready(
        bernoulli_decoder(z, w1, b1, w2, b2, out_dtype=jnp.bfloat16))
    assert y2.shape == (batch, output_dim)
    assert jnp.allclose(y2.astype(jnp.float32), y_ref_f32, atol=3e-2, rtol=0)

    print("KERNEL_OK")
</pallas_src>

<mosaic_0001>
module attributes {stable_mosaic.version = 11 : i64} {
  func.func @_decoder_kernel(%arg0: i32, %arg1: i32, %arg2: memref<32x2xf32, #tpu.memory_space<vmem>>, %arg3: memref<2x384xf32, #tpu.memory_space<vmem>>, %arg4: memref<1x384xf32, #tpu.memory_space<vmem>>, %arg5: memref<384x256xbf16, #tpu.memory_space<vmem>>, %arg6: memref<1x256xf32, #tpu.memory_space<vmem>>, %arg7: memref<32x256xf32, #tpu.memory_space<vmem>>, %arg8: memref<32x384xbf16, #tpu.memory_space<vmem>>) attributes {dimension_semantics = [#tpu.dimension_semantics<parallel>, #tpu.dimension_semantics<arbitrary>], iteration_bounds = array<i64: 1, 4>, scalar_prefetch = 0 : i64, scratch_operands = 1 : i64, tpu.core_type = #tpu.core_type<tc>, window_params = [{transform_indices = @transform_0, window_bounds = array<i64: 32, 2>}, {pipeline_mode = #tpu.pipeline_mode<synchronous>, transform_indices = @transform_1, window_bounds = array<i64: 2, 384>}, {pipeline_mode = #tpu.pipeline_mode<synchronous>, transform_indices = @transform_2, window_bounds = array<i64: 1, 384>}, {transform_indices = @transform_3, window_bounds = array<i64: 384, 256>}, {transform_indices = @transform_4, window_bounds = array<i64: 1, 256>}, {transform_indices = @transform_5, window_bounds = array<i64: 32, 256>}]} {
    %c0_i32 = arith.constant 0 : i32
    %0 = arith.cmpi eq, %arg1, %c0_i32 : i32
    %1 = arith.extui %0 : i1 to i32
    %c0_i32_0 = arith.constant 0 : i32
    %2 = arith.cmpi ne, %1, %c0_i32_0 : i32
    scf.if %2 {
      %c0_11 = arith.constant 0 : index
      %c0_12 = arith.constant 0 : index
      %17 = vector.load %arg2[%c0_11, %c0_12] : memref<32x2xf32, #tpu.memory_space<vmem>>, vector<32x2xf32>
      %c0_13 = arith.constant 0 : index
      %c0_14 = arith.constant 0 : index
      %18 = vector.load %arg3[%c0_13, %c0_14] : memref<2x384xf32, #tpu.memory_space<vmem>>, vector<2x384xf32>
      %19 = vector.extract_strided_slice %17 {offsets = [0, 0], sizes = [32, 1], strides = [1, 1]} : vector<32x2xf32> to vector<32x1xf32>
      %20 = vector.extract_strided_slice %18 {offsets = [0, 0], sizes = [1, 384], strides = [1, 1]} : vector<2x384xf32> to vector<1x384xf32>
      %21 = vector.broadcast %19 : vector<32x1xf32> to vector<32x384xf32>
      %22 = vector.broadcast %20 : vector<1x384xf32> to vector<32x384xf32>
      %23 = arith.mulf %21, %22 : vector<32x384xf32>
      %c0_15 = arith.constant 0 : index
      %c0_16 = arith.constant 0 : index
      %24 = vector.load %arg4[%c0_15, %c0_16] : memref<1x384xf32, #tpu.memory_space<vmem>>, vector<1x384xf32>
      %25 = vector.broadcast %24 : vector<1x384xf32> to vector<32x384xf32>
      %26 = arith.addf %23, %25 : vector<32x384xf32>
      %27 = vector.extract_strided_slice %17 {offsets = [0, 1], sizes = [32, 1], strides = [1, 1]} : vector<32x2xf32> to vector<32x1xf32>
      %28 = vector.extract_strided_slice %18 {offsets = [1, 0], sizes = [1, 384], strides = [1, 1]} : vector<2x384xf32> to vector<1x384xf32>
      %29 = vector.broadcast %27 : vector<32x1xf32> to vector<32x384xf32>
      %30 = vector.broadcast %28 : vector<1x384xf32> to vector<32x384xf32>
      %31 = arith.mulf %29, %30 : vector<32x384xf32>
      %32 = arith.addf %26, %31 : vector<32x384xf32>
      %33 = math.tanh %32 : vector<32x384xf32>
      %34 = arith.truncf %33 : vector<32x384xf32> to vector<32x384xbf16>
      %c0_17 = arith.constant 0 : index
      %c0_18 = arith.constant 0 : index
      %35 = vector.load %arg8[%c0_17, %c0_18] : memref<32x384xbf16, #tpu.memory_space<vmem>>, vector<32x384xbf16>
      tpu.vector_store %arg8[%c0_17, %c0_18], %34 {strides = array<i32>} : memref<32x384xbf16, #tpu.memory_space<vmem>>, vector<32x384xbf16>,
    } else {
    }
    %c0 = arith.constant 0 : index
    %c0_1 = arith.constant 0 : index
    %3 = vector.load %arg8[%c0, %c0_1] : memref<32x384xbf16, #tpu.memory_space<vmem>>, vector<32x384xbf16>
    %c0_2 = arith.constant 0 : index
    %c0_3 = arith.constant 0 : index
    %4 = vector.load %arg5[%c0_2, %c0_3] : memref<384x256xbf16, #tpu.memory_space<vmem>>, vector<384x256xbf16>
    %cst = arith.constant dense<0.000000e+00> : vector<32x256xf32>
    %5 = tpu.matmul %3, %4, %cst {dimension_numbers = #tpu.dot_dimension_numbers<[1], [0], [0], [1], [0, 0, 1, 1], [], []>} : vector<32x384xbf16>, vector<384x256xbf16>, vector<32x256xf32> -> vector<32x256xf32>
    %c0_4 = arith.constant 0 : index
    %c0_5 = arith.constant 0 : index
    %6 = vector.load %arg6[%c0_4, %c0_5] : memref<1x256xf32, #tpu.memory_space<vmem>>, vector<1x256xf32>
    %7 = vector.broadcast %6 : vector<1x256xf32> to vector<32x256xf32>
    %8 = arith.addf %5, %7 : vector<32x256xf32>
    %cst_6 = arith.constant 5.000000e-01 : f32
    %9 = vector.broadcast %cst_6 : f32 to vector<32x256xf32>
    %10 = arith.mulf %9, %8 : vector<32x256xf32>
    %11 = math.tanh %10 : vector<32x256xf32>
    %cst_7 = arith.constant 5.000000e-01 : f32
    %12 = vector.broadcast %cst_7 : f32 to vector<32x256xf32>
    %13 = arith.mulf %12, %11 : vector<32x256xf32>
    %cst_8 = arith.constant 5.000000e-01 : f32
    %14 = vector.broadcast %cst_8 : f32 to vector<32x256xf32>
    %15 = arith.addf %13, %14 : vector<32x256xf32>
    %c0_9 = arith.constant 0 : index
    %c0_10 = arith.constant 0 : index
    %16 = vector.load %arg7[%c0_9, %c0_10] : memref<32x256xf32, #tpu.memory_space<vmem>>, vector<32x256xf32>
    tpu.vector_store %arg7[%c0_9, %c0_10], %15 {strides = array<i32>} : memref<32x256xf32, #tpu.memory_space<vmem>>, vector<32x256xf32>,
    return
  }
  func.func @transform_0(%arg0: i32, %arg1: i32) -> (i32, i32) {
    %c0_i32 = arith.constant 0 : i32
    %c0_i32_0 = arith.constant 0 : i32
    return %arg0, %c0_i32 : i32, i32
  }
  func.func @transform_1(%arg0: i32, %arg1: i32) -> (i32, i32) {
    %c0_i32 = arith.constant 0 : i32
    %c0_i32_0 = arith.constant 0 : i32
    %c0_i32_1 = arith.constant 0 : i32
    return %c0_i32, %c0_i32_0 : i32, i32
  }
  func.func @transform_2(%arg0: i32, %arg1: i32) -> (i32, i32) {
    %c0_i32 = arith.constant 0 : i32
    %c0_i32_0 = arith.constant 0 : i32
    %c0_i32_1 = arith.constant 0 : i32
    return %c0_i32, %c0_i32_0 : i32, i32
  }
  func.func @transform_3(%arg0: i32, %arg1: i32) -> (i32, i32) {
    %c0_i32 = arith.constant 0 : i32
    %c0_i32_0 = arith.constant 0 : i32
    return %c0_i32, %arg1 : i32, i32
  }
  func.func @transform_4(%arg0: i32, %arg1: i32) -> (i32, i32) {
    %c0_i32 = arith.constant 0 : i32
    %c0_i32_0 = arith.constant 0 : i32
    return %c0_i32, %arg1 : i32, i32
  }
  func.func @transform_5(%arg0: i32, %arg1: i32) -> (i32, i32) {
    %c0_i32 = arith.constant 0 : i32
    return %arg0, %arg1 : i32, i32
  }
}

</mosaic_0001>

<llo_original>
// kernel: bernoulli_decoder_forward.1
$region0: #{bernoulli_decoder_forward.1}
  #allocation0 [shape = 'u32[]', space=smem, size = 0x4, offset = 0x4, fixed_abs, tag = 'smem constant byte address 0x4 - core index']
  #allocation1 [shape = 'u32[144,128]{1,0:T(1,128)}', space=vmem, size = 0x12000, scoped, tag = 'internal scratch']
  #allocation2 [shape = 'bf16[32,384]{1,0:T(8,128)(2,1)}', space=vmem, size = 0x6000, scoped, tag = 'scratch operand']
  %s0 = inlined_call_operand.vmem [shape: f32[32,2], index: 0, kind: input, shape index: {}]
  %s1 = inlined_call_operand.vmem [shape: f32[2,384], index: 1, kind: input, shape index: {}]
  %s2 = inlined_call_operand.vmem [shape: f32[1,384], index: 2, kind: input, shape index: {}]
  %s3 = inlined_call_operand.hbm [shape: bf16[384,1024], index: 3, kind: input, shape index: {}]
  %s4 = inlined_call_operand.vmem [shape: f32[1,1024], index: 4, kind: input, shape index: {}]
  %s5 = inlined_call_operand.vmem [shape: f32[32,1024], index: 5, kind: output, shape index: {}]
  %s6 = sld [smem:[#allocation0]]
  $region80: #{bernoulli_decoder_forward.1} parent=0
    _
  %s8 = ssub.s32 1, %s6
  %s9 = scalar_select 0, %s8, %s6
  $region1: #{bernoulli_decoder_forward.1} parent=0
    #allocation3 [shape = 'u8[393216]{0}', space=vmem, size = 0x60000, scoped, tag = 'input window, operand 3']
    #allocation4 [shape = 's32[2]{0}', space=sflag, size = 0x8, scoped, tag = 'scoped memory for bernoulli_decoder_forward.1']
    #allocation5 [shape = 'u8[65536]{0}', space=vmem, size = 0x10000, scoped, tag = 'output window, operand 0']
    %10 = vsyncpa [#allocation4], 0
    %s11 = scalar_lea.sflag [#allocation4], 1
    %12 = vsyncpa %s11, 0
    loop: start=0, step=1, limit=6
    $region2: #{bernoulli_decoder_forward.1} parent=1 // loop_pre_header
      _
    $region3: #{bernoulli_decoder_forward.1} parent=1 // loop_header
      %s14 = sphi 0, %s18
      %p15 = scmp.ge.s32.totalorder %s14, 6
      %s21 = sphi 0, %s33
      %s22 = sphi 0, %s29
      %s23 = sphi 0, %s21
      %s24 = sphi 0, %s22
      %s25 = sphi 0, %s23
      %s26 = sphi 0, %s24
      %s36 = sphi 0, %s38
      %s39 = sphi 0, %s36
      %s40 = sphi 0, %s39
      %s56 = sphi 0, %s40
      %s60 = sphi 0, %s60
      %s62 = sphi 0, %s60
      %s63 = sphi 0, %s62
      %s77 = sphi 0, %s63
      %s81 = sphi 0, %s81
      %s83 = sphi 0, %s81
      %s84 = sphi 0, %s83
      %s98 = sphi 0, %s84
      %s104 = sphi 0, %s106
      %s107 = sphi 0, %s104
      %s108 = sphi 0, %s107
      %s124 = sphi 0, %s108
      %s130 = sphi 0, %s132
      %s133 = sphi 0, %s130
      %s134 = sphi 0, %s133
      %s150 = sphi 0, %s134
      %s158 = sphi 0, %s160
      %s161 = sphi 0, %s158
      %s162 = sphi 0, %s161
      %s178 = sphi 0, %s162
    $region4: #{bernoulli_decoder_forward.1} parent=1 // loop_header_branch
      %17 = sbr.rel (%p15) target = $region8
    $region5: #{bernoulli_decoder_forward.1} parent=1 // loop_body
      %s19 = ssub.s32 %s14, 1
      %s20 = ssub.s32 %s14, 2
      %s27 = sadd.s32 1, %s22
      %p28 = scmp.ge.s32.totalorder %s27, 4
      %s29 = scalar_select %p28, 0, %s27
      %s30 = sadd.s32 1, %s21
      %s31 = scalar_select %p28, %s30, %s21
      %p32 = scmp.ge.s32.totalorder %s31, 1
      %s33 = scalar_select %p32, 0, %s31
      %s34 = ssub.s32 %s21, %s33
      %p35 = scmp.eq.s32.totalorder %s34, 0
      %s37 = sadd.s32 %s36, 1
      %s38 = scalar_select %p35, %s36, %s37
      %p41 = pneg %p35
      %p42 = scmp.eq.s32.totalorder %s14, 3
      %p43 = por %p41, %p42
      %p44 = scmp.ne.s32.totalorder %s36, %s39
      %p45 = scmp.eq.s32.totalorder %s14, 0
      %p46 = por %p44, %p45
      %p47 = scmp.ne.s32.totalorder %s36, %s39
      %p48 = scmp.eq.s32.totalorder %s19, 3
      %p49 = por %p47, %p48
      %p50 = scmp.ne.s32.totalorder %s39, %s40
      %p51 = scmp.eq.s32.totalorder %s19, 0
      %p52 = por %p50, %p51
      %p53 = scmp.ne.s32.totalorder %s39, %s40
      %p54 = scmp.eq.s32.totalorder %s20, 3
      %p55 = por %p53, %p54
      %p57 = scmp.ne.s32.totalorder %s40, %s56
      %p58 = scmp.eq.s32.totalorder %s20, 0
      %p59 = por %p57, %p58
      %s61 = sadd.s32 %s60, 1
      %p64 = scmp.eq.s32.totalorder %s14, 3
      %p65 = scmp.ne.s32.totalorder %s60, %s62
      %p66 = scmp.eq.s32.totalorder %s14, 0
      %p67 = por %p65, %p66
      %p68 = scmp.ne.s32.totalorder %s60, %s62
      %p69 = scmp.eq.s32.totalorder %s19, 3
      %p70 = por %p68, %p69
      %p71 = scmp.ne.s32.totalorder %s62, %s63
      %p72 = scmp.eq.s32.totalorder %s19, 0
      %p73 = por %p71, %p72
      %p74 = scmp.ne.s32.totalorder %s62, %s63
      %p75 = scmp.eq.s32.totalorder %s20, 3
      %p76 = por %p74, %p75
      %p78 = scmp.ne.s32.totalorder %s63, %s77
      %p79 = scmp.eq.s32.totalorder %s20, 0
      %p80 = por %p78, %p79
      %s82 = sadd.s32 %s81, 1
      %p85 = scmp.eq.s32.totalorder %s14, 3
      %p86 = scmp.ne.s32.totalorder %s81, %s83
      %p87 = scmp.eq.s32.totalorder %s14, 0
      %p88 = por %p86, %p87
      %p89 = scmp.ne.s32.totalorder %s81, %s83
      %p90 = scmp.eq.s32.totalorder %s19, 3
      %p91 = por %p89, %p90
      %p92 = scmp.ne.s32.totalorder %s83, %s84
      %p93 = scmp.eq.s32.totalorder %s19, 0
      %p94 = por %p92, %p93
      %p95 = scmp.ne.s32.totalorder %s83, %s84
      %p96 = scmp.eq.s32.totalorder %s20, 3
      %p97 = por %p95, %p96
      %p99 = scmp.ne.s32.totalorder %s84, %s98
      %p100 = scmp.eq.s32.totalorder %s20, 0
      %p101 = por %p99, %p100
      %s102 = ssub.s32 %s22, %s29
      %p103 = scmp.eq.s32.totalorder %s102, 0
      %s105 = sadd.s32 %s104, 1
      %s106 = scalar_select %p103, %s104, %s105
      %p109 = pneg %p103
      %p110 = scmp.eq.s32.totalorder %s14, 3
      %p111 = por %p109, %p110
      %p112 = scmp.ne.s32.totalorder %s104, %s107
      %p113 = scmp.eq.s32.totalorder %s14, 0
      %p114 = por %p112, %p113
      %p115 = scmp.ne.s32.totalorder %s104, %s107
      %p116 = scmp.eq.s32.totalorder %s19, 3
      %p117 = por %p115, %p116
      %p118 = scmp.ne.s32.totalorder %s107, %s108
      %p119 = scmp.eq.s32.totalorder %s19, 0
      %p120 = por %p118, %p119
      %p121 = scmp.ne.s32.totalorder %s107, %s108
      %p122 = scmp.eq.s32.totalorder %s20, 3
      %p123 = por %p121, %p122
      %p125 = scmp.ne.s32.totalorder %s108, %s124
      %p126 = scmp.eq.s32.totalorder %s20, 0
      %p127 = por %p125, %p126
      %s128 = ssub.s32 %s22, %s29
      %p129 = scmp.eq.s32.totalorder %s128, 0
      %s131 = sadd.s32 %s130, 1
      %s132 = scalar_select %p129, %s130, %s131
      %p135 = pneg %p129
      %p136 = scmp.eq.s32.totalorder %s14, 3
      %p137 = por %p135, %p136
      %p138 = scmp.ne.s32.totalorder %s130, %s133
      %p139 = scmp.eq.s32.totalorder %s14, 0
      %p140 = por %p138, %p139
      %p141 = scmp.ne.s32.totalorder %s130, %s133
      %p142 = scmp.eq.s32.totalorder %s19, 3
      %p143 = por %p141, %p142
      %p144 = scmp.ne.s32.totalorder %s133, %s134
      %p145 = scmp.eq.s32.totalorder %s19, 0
      %p146 = por %p144, %p145
      %p147 = scmp.ne.s32.totalorder %s133, %s134
      %p148 = scmp.eq.s32.totalorder %s20, 3
      %p149 = por %p147, %p148
      %p151 = scmp.ne.s32.totalorder %s134, %s150
      %p152 = scmp.eq.s32.totalorder %s20, 0
      %p153 = por %p151, %p152
      %s154 = ssub.s32 %s21, %s33
      %s155 = ssub.s32 %s22, %s29
      %s156 = sor.u32 %s154, %s155
      %p157 = scmp.eq.s32.totalorder %s156, 0
      %s159 = sadd.s32 %s158, 1
      %s160 = scalar_select %p157, %s158, %s159
      %p163 = pneg %p157
      %p164 = scmp.eq.s32.totalorder %s14, 3
      %p165 = por %p163, %p164
      %p166 = scmp.ne.s32.totalorder %s158, %s161
      %p167 = scmp.eq.s32.totalorder %s14, 0
      %p168 = por %p166, %p167
      %p169 = scmp.ne.s32.totalorder %s158, %s161
      %p170 = scmp.eq.s32.totalorder %s19, 3
      %p171 = por %p169, %p170
      %p172 = scmp.ne.s32.totalorder %s161, %s162
      %p173 = scmp.eq.s32.totalorder %s19, 0
      %p174 = por %p172, %p173
      %p175 = scmp.ne.s32.totalorder %s161, %s162
      %p176 = scmp.eq.s32.totalorder %s20, 3
      %p177 = por %p175, %p176
      %p179 = scmp.ne.s32.totalorder %s162, %s178
      %p180 = scmp.eq.s32.totalorder %s20, 0
      %p181 = por %p179, %p180
      %p182 = scmp.le.s32.totalorder 1, %s14
      %p183 = scmp.lt.s32.totalorder %s14, 5
      %p184 = pnand %p182, %p183
      %p185 = pneg %p184
      // Predicated region
      $region9: #{bernoulli_decoder_forward.1} parent=5 // pred_check
        _
      $region10: #{bernoulli_decoder_forward.1} parent=5 // pred_check_branch
        %187 = sbr.rel (%p184) target = $region12
      $region11: #{bernoulli_decoder_forward.1} parent=5 // pred_region
        %s188 = ssub.s32 %s14, 1
        // Predicated region
        $region13: #{bernoulli_decoder_forward.1} parent=11 // pred_check
          %p189 = pneg %p52
        $region14: #{bernoulli_decoder_forward.1} parent=11 // pred_check_branch
          %191 = sbr.rel (%p189) target = $region16
        $region15: #{bernoulli_decoder_forward.1} parent=11 // pred_region
          %s192 = smul.u32 4, %s23
          %p193 = scmp.lt.s32.totalorder %s192, 3
          %s194 = scalar_select %p193, %s192, 3
          %s195 = smul.addr %s194, 8
          %s196 = scalar_lea.vmem %s0, %s195
          %s197 = smul.u32 4, %s23
        $region16: #{bernoulli_decoder_forward.1} parent=11 // pred_fallthru
          _
        // Predicated region
        $region17: #{bernoulli_decoder_forward.1} parent=11 // pred_check
          %p198 = pneg %p73
        $region18: #{bernoulli_decoder_forward.1} parent=11 // pred_check_branch
          %200 = sbr.rel (%p198) target = $region20
        $region19: #{bernoulli_decoder_forward.1} parent=11 // pred_region
          _
        $region20: #{bernoulli_decoder_forward.1} parent=11 // pred_fallthru
          _
        // Predicated region
        $region21: #{bernoulli_decoder_forward.1} parent=11 // pred_check
          %p201 = pneg %p94
        $region22: #{bernoulli_decoder_forward.1} parent=11 // pred_check_branch
          %203 = sbr.rel (%p201) target = $region24
        $region23: #{bernoulli_decoder_forward.1} parent=11 // pred_region
          _
        $region24: #{bernoulli_decoder_forward.1} parent=11 // pred_fallthru
          _
      $region12: #{bernoulli_decoder_forward.1} parent=5 // pred_fallthru
        _
      %p204 = scmp.lt.s32.totalorder %s14, 4
      // Predicated region
      $region25: #{bernoulli_decoder_forward.1} parent=5 // pred_check
        %p205 = pneg %p204
      $region26: #{bernoulli_decoder_forward.1} parent=5 // pred_check_branch
        %207 = sbr.rel (%p205) target = $region28
      $region27: #{bernoulli_decoder_forward.1} parent=5 // pred_region
        // Predicated region
        $region29: #{bernoulli_decoder_forward.1} parent=27 // pred_check
          %p208 = pneg %p114
        $region30: #{bernoulli_decoder_forward.1} parent=27 // pred_check_branch
          %210 = sbr.rel (%p208) target = $region32
        $region31: #{bernoulli_decoder_forward.1} parent=27 // pred_region
          %s211 = sand.u32 %s104, 1
          %s212 = scalar_lea.sflag [#allocation4], %s211
          %s213 = sand.u32 %s104, 1
          %s214 = smul.addr %s213, 384
          %s215 = scalar_lea.vmem [#allocation3], %s214
          %s216 = smul.u32 2, %s22
          %s218 = ssub.s32 6144, 6144
          %219 = vsyncadd %s212, %s218
          %s220 = smul.addr %s216, 64
          %s221 = scalar_lea.hbm %s3, %s220
          %s222 = sshll.u32 %s215, 4
          %s223 = int_to_ptr.vmem [resolvable:$true] %s222
          %228 = dma.hbm_to_vmem [thread:$0]  %s221, 6144, %s223, %s212, 512, 128, 8
        $region32: #{bernoulli_decoder_forward.1} parent=27 // pred_fallthru
          _
        // Predicated region
        $region33: #{bernoulli_decoder_forward.1} parent=27 // pred_check
          %p229 = pneg %p140
        $region34: #{bernoulli_decoder_forward.1} parent=27 // pred_check_branch
          %231 = sbr.rel (%p229) target = $region36
        $region35: #{bernoulli_decoder_forward.1} parent=27 // pred_region
          %s232 = smul.u32 2, %s22
          %p233 = scmp.lt.s32.totalorder %s232, 7
          %s234 = scalar_select %p233, %s232, 7
          %s235 = scalar_lea.vmem %s4, %s234
          %s236 = smul.u32 2, %s22
        $region36: #{bernoulli_decoder_forward.1} parent=27 // pred_fallthru
          _
      $region28: #{bernoulli_decoder_forward.1} parent=5 // pred_fallthru
        _
      %p237 = scmp.le.s32.totalorder 1, %s14
      %p238 = scmp.lt.s32.totalorder %s14, 5
      %p239 = pnand %p237, %p238
      %p240 = pneg %p239
      // Predicated region
      $region37: #{bernoulli_decoder_forward.1} parent=5 // pred_check
        _
      $region38: #{bernoulli_decoder_forward.1} parent=5 // pred_check_branch
        %242 = sbr.rel (%p239) target = $region40
      $region39: #{bernoulli_decoder_forward.1} parent=5 // pred_region
        %s243 = ssub.s32 %s14, 1
        %s244 = sand.u32 %s107, 1
        %s245 = scalar_lea.sflag [#allocation4], %s244
        %s246 = sand.u32 %s107, 1
        %s247 = smul.addr %s246, 384
        %s248 = scalar_lea.vmem [#allocation3], %s247
        // Predicated region
        $region41: #{bernoulli_decoder_forward.1} parent=39 // pred_check
          %p249 = pneg %p120
        $region42: #{bernoulli_decoder_forward.1} parent=39 // pred_check_branch
          %251 = sbr.rel (%p249) target = $region44
        $region43: #{bernoulli_decoder_forward.1} parent=39 // pred_region
          %252 = dma.done %s245, 6144
        $region44: #{bernoulli_decoder_forward.1} parent=39 // pred_fallthru
          _
        %s253 = smul.u32 4, %s23
        %p254 = scmp.lt.s32.totalorder %s253, 3
        %s255 = scalar_select %p254, %s253, 3
        %s256 = smul.addr %s255, 8
        %s257 = scalar_lea.vmem %s0, %s256
        %p258 = pneg %p52
        %p259 = pneg %p49
        %p260 = pneg %p73
        %p261 = pneg %p70
        %p262 = pneg %p94
        %p263 = pneg %p91
        %s264 = sand.u32 %s107, 1
        %s265 = scalar_lea.sflag [#allocation4], %s264
        %s266 = sand.u32 %s107, 1
        %s267 = smul.addr %s266, 384
        %s268 = scalar_lea.vmem [#allocation3], %s267
        %p269 = pneg %p120
        %p270 = pneg %p117
        %s271 = smul.u32 2, %s24
        %p272 = scmp.lt.s32.totalorder %s271, 7
        %s273 = scalar_select %p272, %s271, 7
        %s274 = scalar_lea.vmem %s4, %s273
        %p275 = pneg %p146
        %p276 = pneg %p143
        %p277 = pneg %p174
        %p278 = pneg %p171
        %s279 = sand.u32 %s161, 1
        %s280 = sand.u32 %s161, 1
        %s281 = smul.addr %s280, 64
        %s282 = scalar_lea.vmem [#allocation5], %s281
        %s283 = smul.u32 4, %s23
        %p284 = scmp.lt.s32.totalorder %s283, 3
        %s285 = scalar_select %p284, %s283, 3
        %s286 = smul.addr %s285, 8
        %s287 = scalar_lea.vmem %s0, %s286
        %s288 = smul.u32 4, %s23
        %s289 = smul.u32 2, %s24
        %s290 = smul.u32 2, %s24
        %p291 = scmp.lt.s32.totalorder %s290, 7
        %s292 = scalar_select %p291, %s290, 7
        %s293 = scalar_lea.vmem %s4, %s292
        %s294 = smul.u32 2, %s24
        %s295 = smul.u32 4, %s23
        %s296 = smul.u32 2, %s24
        %p298 = scmp.eq.s32.totalorder %s24, 0
        // Predicated region
        $region45: #{bernoulli_decoder_forward.1} parent=39 // pred_check
          %p299 = pneg %p298
        $region46: #{bernoulli_decoder_forward.1} parent=39 // pred_check_branch
          %301 = sbr.rel (%p299) target = $region48
        $region47: #{bernoulli_decoder_forward.1} parent=39 // pred_region
          %v302 = vld [vmem:[%s287] sm:$0xff]
          %v303 = vld [vmem:[%s287 + $0x8] sm:$0xff]
          %v304 = vld [vmem:[%s287 + $0x10] sm:$0xff]
          %v305 = vld [vmem:[%s287 + $0x18] sm:$0xff]
          %v306 = vld [vmem:[%s1] sm:$0x3f]
          %308 = vset.pattern.permute.xlu0 0
          %309 = vperm.xlu0 %308, %v302
          %v310 = vpop.permute.xlu0 %309
          %313 = vset.pattern.permute.xlu0 0
          %314 = vperm.xlu0 %313, %v303
          %v315 = vpop.permute.xlu0 %314
          %318 = vset.pattern.permute.xlu0 0
          %319 = vperm.xlu0 %318, %v304
          %v320 = vpop.permute.xlu0 %319
          %323 = vset.pattern.permute.xlu0 0
          %324 = vperm.xlu0 %323, %v305
          %v325 = vpop.permute.xlu0 %324
          %v328 = vlaneseq
          %v329 = vshrl.u32 %v328, 7
          %v330 = vsub.s32 0, %v329
          %v331 = vrot.slane %v306, %v330
          %v332 = vlaneseq
          %v333 = vshrl.u32 %v332, 7
          %v334 = vsub.s32 2, %v333
          %v335 = vrot.slane %v306, %v334
          %v336 = vlaneseq
          %v337 = vshrl.u32 %v336, 7
          %v338 = vsub.s32 4, %v337
          %v339 = vrot.slane %v306, %v338
          %v343 = vlaneseq
          %v344 = vshrl.u32 %v343, 7
          %v345 = vsub.s32 0, %v344
          %v346 = vrot.slane %v331, %v345
          %v347 = vlaneseq
          %v348 = vshrl.u32 %v347, 7
          %v349 = vsub.s32 0, %v348
          %v350 = vrot.slane %v335, %v349
          %v351 = vlaneseq
          %v352 = vshrl.u32 %v351, 7
          %v353 = vsub.s32 0, %v352
          %v354 = vrot.slane %v339, %v353
          %v355 = vmul.f32 %v310, %v346
          %v356 = vmul.f32 %v310, %v350
          %v357 = vmul.f32 %v310, %v354
          %v358 = vmul.f32 %v315, %v346
          %v359 = vmul.f32 %v315, %v350
          %v360 = vmul.f32 %v315, %v354
          %v361 = vmul.f32 %v320, %v346
          %v362 = vmul.f32 %v320, %v350
          %v363 = vmul.f32 %v320, %v354
          %v364 = vmul.f32 %v325, %v346
          %v365 = vmul.f32 %v325, %v350
          %v366 = vmul.f32 %v325, %v354
          %v367 = vld [vmem:[%s2] sm:$0x7]
          %v369 = vlaneseq
          %v370 = vshrl.u32 %v369, 7
          %v371 = vsub.s32 0, %v370
          %v372 = vrot.slane %v367, %v371
          %v373 = vlaneseq
          %v374 = vshrl.u32 %v373, 7
          %v375 = vsub.s32 1, %v374
          %v376 = vrot.slane %v367, %v375
          %v377 = vlaneseq
          %v378 = vshrl.u32 %v377, 7
          %v379 = vsub.s32 2, %v378
          %v380 = vrot.slane %v367, %v379
          %v384 = vadd.f32 %v355, %v372
          %v385 = vadd.f32 %v356, %v376
          %v386 = vadd.f32 %v357, %v380
          %v387 = vadd.f32 %v358, %v372
          %v388 = vadd.f32 %v359, %v376
          %v389 = vadd.f32 %v360, %v380
          %v390 = vadd.f32 %v361, %v372
          %v391 = vadd.f32 %v362, %v376
          %v392 = vadd.f32 %v363, %v380
          %v393 = vadd.f32 %v364, %v372
          %v394 = vadd.f32 %v365, %v376
          %v395 = vadd.f32 %v366, %v380
          %396 = vset.pattern.permute.xlu0 1
          %397 = vperm.xlu0 %396, %v302
          %v398 = vpop.permute.xlu0 %397
          %400 = vset.pattern.permute.xlu0 1
          %401 = vperm.xlu0 %400, %v303
          %v402 = vpop.permute.xlu0 %401
          %404 = vset.pattern.permute.xlu0 1
          %405 = vperm.xlu0 %404, %v304
          %v406 = vpop.permute.xlu0 %405
          %408 = vset.pattern.permute.xlu0 1
          %409 = vperm.xlu0 %408, %v305
          %v410 = vpop.permute.xlu0 %409
          %v412 = vlaneseq
          %v413 = vshrl.u32 %v412, 7
          %v414 = vsub.s32 1, %v413
          %v415 = vrot.slane %v306, %v414
          %v416 = vlaneseq
          %v417 = vshrl.u32 %v416, 7
          %v418 = vsub.s32 3, %v417
          %v419 = vrot.slane %v306, %v418
          %v420 = vlaneseq
          %v421 = vshrl.u32 %v420, 7
          %v422 = vsub.s32 5, %v421
          %v423 = vrot.slane %v306, %v422
          %v427 = vlaneseq
          %v428 = vshrl.u32 %v427, 7
          %v429 = vsub.s32 1, %v428
          %v430 = vrot.slane %v415, %v429
          %v431 = vlaneseq
          %v432 = vshrl.u32 %v431, 7
          %v433 = vsub.s32 1, %v432
          %v434 = vrot.slane %v419, %v433
          %v435 = vlaneseq
          %v436 = vshrl.u32 %v435, 7
          %v437 = vsub.s32 1, %v436
          %v438 = vrot.slane %v423, %v437
          %v439 = vmul.f32 %v398, %v430
          %v440 = vmul.f32 %v398, %v434
          %v441 = vmul.f32 %v398, %v438
          %v442 = vmul.f32 %v402, %v430
          %v443 = vmul.f32 %v402, %v434
          %v444 = vmul.f32 %v402, %v438
          %v445 = vmul.f32 %v406, %v430
          %v446 = vmul.f32 %v406, %v434
          %v447 = vmul.f32 %v406, %v438
          %v448 = vmul.f32 %v410, %v430
          %v449 = vmul.f32 %v410, %v434
          %v450 = vmul.f32 %v410, %v438
          %v451 = vadd.f32 %v384, %v439
          %v452 = vadd.f32 %v385, %v440
          %v453 = vadd.f32 %v386, %v441
          %v454 = vadd.f32 %v387, %v442
          %v455 = vadd.f32 %v388, %v443
          %v456 = vadd.f32 %v389, %v444
          %v457 = vadd.f32 %v390, %v445
          %v458 = vadd.f32 %v391, %v446
          %v459 = vadd.f32 %v392, %v447
          %v460 = vadd.f32 %v393, %v448
          %v461 = vadd.f32 %v394, %v449
          %v462 = vadd.f32 %v395, %v450
          %v463 = vtanh.pop %v451
          %v464 = vtanh.pop %v452
          %v465 = vtanh.pop %v453
          %v466 = vtanh.pop %v454
          %v467 = vtanh.pop %v455
          %v468 = vtanh.pop %v456
          %v469 = vtanh.pop %v457
          %v470 = vtanh.pop %v458
          %v471 = vtanh.pop %v459
          %v472 = vtanh.pop %v460
          %v473 = vtanh.pop %v461
          %v474 = vtanh.pop %v462
          %v475 = vpack.c.bf16 %v466, %v463
          %v476 = vpack.c.bf16 %v467, %v464
          %v477 = vpack.c.bf16 %v468, %v465
          %v478 = vpack.c.bf16 %v472, %v469
          %v479 = vpack.c.bf16 %v473, %v470
          %v480 = vpack.c.bf16 %v474, %v471
          %v487 = vunpack.c.l.b16 %v475
          %v488 = vunpack.c.l.b16 %v476
          %v489 = vunpack.c.l.b16 %v477
          %v490 = vunpack.c.h.b16 %v475
          %v491 = vunpack.c.h.b16 %v476
          %v492 = vunpack.c.h.b16 %v477
          %v493 = vunpack.c.l.b16 %v478
          %v494 = vunpack.c.l.b16 %v479
          %v495 = vunpack.c.l.b16 %v480
          %v496 = vunpack.c.h.b16 %v478
          %v497 = vunpack.c.h.b16 %v479
          %v498 = vunpack.c.h.b16 %v480
          %v499 = vpack.c.b16 %v488, %v487
          %v500 = vpack.c.b16 %v489, %v489
          %v501 = vpack.c.b16 %v491, %v490
          %v502 = vpack.c.b16 %v492, %v492
          %v503 = vpack.c.b16 %v494, %v493
          %v504 = vpack.c.b16 %v495, %v495
          %v505 = vpack.c.b16 %v497, %v496
          %v506 = vpack.c.b16 %v498, %v498
          %515 = vst [vmem:[#allocation2] sm:$0xff] %v499
          %516 = vst [vmem:[#allocation2 + $0x8] sm:$0xf] %v500
          %517 = vst [vmem:[#allocation2 + $0xc] sm:$0xff] %v501
          %518 = vst [vmem:[#allocation2 + $0x14] sm:$0xf] %v502
          %519 = vst [vmem:[#allocation2 + $0x18] sm:$0xff] %v503
          %520 = vst [vmem:[#allocation2 + $0x20] sm:$0xf] %v504
          %521 = vst [vmem:[#allocation2 + $0x24] sm:$0xff] %v505
          %522 = vst [vmem:[#allocation2 + $0x2c] sm:$0xf] %v506
        $region48: #{bernoulli_decoder_forward.1} parent=39 // pred_fallthru
          _
        %v523 = vld [vmem:[#allocation2] sm:$0xff]
        %v524 = vld [vmem:[#allocation2 + $0x8] sm:$0xf]
        %v525 = vld [vmem:[#allocation2 + $0xc] sm:$0xff]
        %v526 = vld [vmem:[#allocation2 + $0x14] sm:$0xf]
        %v527 = vld [vmem:[#allocation2 + $0x18] sm:$0xff]
        %v528 = vld [vmem:[#allocation2 + $0x20] sm:$0xf]
        %v529 = vld [vmem:[#allocation2 + $0x24] sm:$0xff]
        %v530 = vld [vmem:[#allocation2 + $0x2c] sm:$0xf]
        %v531 = vld [vmem:[%s248] sm:$0xff]
        %v532 = vld [vmem:[%s248 + $0x8] sm:$0xff]
        %v533 = vld [vmem:[%s248 + $0x10] sm:$0xff]
        %v534 = vld [vmem:[%s248 + $0x18] sm:$0xff]
        %v535 = vld [vmem:[%s248 + $0x20] sm:$0xff]
        %v536 = vld [vmem:[%s248 + $0x28] sm:$0xff]
        %v537 = vld [vmem:[%s248 + $0x30] sm:$0xff]
        %v538 = vld [vmem:[%s248 + $0x38] sm:$0xff]
        %v539 = vld [vmem:[%s248 + $0x40] sm:$0xff]
        %v540 = vld [vmem:[%s248 + $0x48] sm:$0xff]
        %v541 = vld [vmem:[%s248 + $0x50] sm:$0xff]
        %v542 = vld [vmem:[%s248 + $0x58] sm:$0xff]
        %v543 = vld [vmem:[%s248 + $0x60] sm:$0xff]
        %v544 = vld [vmem:[%s248 + $0x68] sm:$0xff]
        %v545 = vld [vmem:[%s248 + $0x70] sm:$0xff]
        %v546 = vld [vmem:[%s248 + $0x78] sm:$0xff]
        %v547 = vld [vmem:[%s248 + $0x80] sm:$0xff]
        %v548 = vld [vmem:[%s248 + $0x88] sm:$0xff]
        %v549 = vld [vmem:[%s248 + $0x90] sm:$0xff]
        %v550 = vld [vmem:[%s248 + $0x98] sm:$0xff]
        %v551 = vld [vmem:[%s248 + $0xa0] sm:$0xff]
        %v552 = vld [vmem:[%s248 + $0xa8] sm:$0xff]
        %v553 = vld [vmem:[%s248 + $0xb0] sm:$0xff]
        %v554 = vld [vmem:[%s248 + $0xb8] sm:$0xff]
        %v555 = vld [vmem:[%s248 + $0xc0] sm:$0xff]
        %v556 = vld [vmem:[%s248 + $0xc8] sm:$0xff]
        %v557 = vld [vmem:[%s248 + $0xd0] sm:$0xff]
        %v558 = vld [vmem:[%s248 + $0xd8] sm:$0xff]
        %v559 = vld [vmem:[%s248 + $0xe0] sm:$0xff]
        %v560 = vld [vmem:[%s248 + $0xe8] sm:$0xff]
        %v561 = vld [vmem:[%s248 + $0xf0] sm:$0xff]
        %v562 = vld [vmem:[%s248 + $0xf8] sm:$0xff]
        %v563 = vld [vmem:[%s248 + $0x100] sm:$0xff]
        %v564 = vld [vmem:[%s248 + $0x108] sm:$0xff]
        %v565 = vld [vmem:[%s248 + $0x110] sm:$0xff]
        %v566 = vld [vmem:[%s248 + $0x118] sm:$0xff]
        %v567 = vld [vmem:[%s248 + $0x120] sm:$0xff]
        %v568 = vld [vmem:[%s248 + $0x128] sm:$0xff]
        %v569 = vld [vmem:[%s248 + $0x130] sm:$0xff]
        %v570 = vld [vmem:[%s248 + $0x138] sm:$0xff]
        %v571 = vld [vmem:[%s248 + $0x140] sm:$0xff]
        %v572 = vld [vmem:[%s248 + $0x148] sm:$0xff]
        %v573 = vld [vmem:[%s248 + $0x150] sm:$0xff]
        %v574 = vld [vmem:[%s248 + $0x158] sm:$0xff]
        %v575 = vld [vmem:[%s248 + $0x160] sm:$0xff]
        %v576 = vld [vmem:[%s248 + $0x168] sm:$0xff]
        %v577 = vld [vmem:[%s248 + $0x170] sm:$0xff]
        %v578 = vld [vmem:[%s248 + $0x178] sm:$0xff]
        %v579 = vld [vmem:[%s293] sm:$0x3]
        %v581 = vlaneseq
        %v582 = vshrl.u32 %v581, 7
        %v583 = vsub.s32 0, %v582
        %v584 = vrot.slane %v579, %v583
        %v585 = vlaneseq
        %v586 = vshrl.u32 %v585, 7
        %v587 = vsub.s32 1, %v586
        %v588 = vrot.slane %v579, %v587
        %v599 = vunpack.c.l.b16 %v523
        %v600 = vunpack.c.h.b16 %v523
        %v601 = vunpack.c.l.b16 %v524
        %v602 = vunpack.c.l.b16 %v525
        %v603 = vunpack.c.h.b16 %v525
        %v604 = vunpack.c.l.b16 %v526
        %v605 = vunpack.c.l.b16 %v527
        %v606 = vunpack.c.h.b16 %v527
        %v607 = vunpack.c.l.b16 %v528
        %v608 = vunpack.c.l.b16 %v529
        %v609 = vunpack.c.h.b16 %v529
        %v610 = vunpack.c.l.b16 %v530
        %v611 = vpack.c.b16 %v602, %v599
        %v612 = vpack.c.b16 %v603, %v600
        %v613 = vpack.c.b16 %v604, %v601
        %v614 = vpack.c.b16 %v608, %v605
        %v615 = vpack.c.b16 %v609, %v606
        %v616 = vpack.c.b16 %v610, %v607
        %v671 = vunpack.c.l.b16 %v531
        %v672 = vunpack.c.h.b16 %v531
        %v673 = vunpack.c.l.b16 %v532
        %v674 = vunpack.c.h.b16 %v532
        %v675 = vunpack.c.l.b16 %v533
        %v676 = vunpack.c.h.b16 %v533
        %v677 = vunpack.c.l.b16 %v534
        %v678 = vunpack.c.h.b16 %v534
        %v679 = vunpack.c.l.b16 %v535
        %v680 = vunpack.c.h.b16 %v535
        %v681 = vunpack.c.l.b16 %v536
        %v682 = vunpack.c.h.b16 %v536
        %v683 = vunpack.c.l.b16 %v537
        %v684 = vunpack.c.h.b16 %v537
        %v685 = vunpack.c.l.b16 %v538
        %v686 = vunpack.c.h.b16 %v538
        %v687 = vunpack.c.l.b16 %v539
        %v688 = vunpack.c.h.b16 %v539
        %v689 = vunpack.c.l.b16 %v540
        %v690 = vunpack.c.h.b16 %v540
        %v691 = vunpack.c.l.b16 %v541
        %v692 = vunpack.c.h.b16 %v541
        %v693 = vunpack.c.l.b16 %v542
        %v694 = vunpack.c.h.b16 %v542
        %v695 = vunpack.c.l.b16 %v543
        %v696 = vunpack.c.h.b16 %v543
        %v697 = vunpack.c.l.b16 %v544
        %v698 = vunpack.c.h.b16 %v544
        %v699 = vunpack.c.l.b16 %v545
        %v700 = vunpack.c.h.b16 %v545
        %v701 = vunpack.c.l.b16 %v546
        %v702 = vunpack.c.h.b16 %v546
        %v703 = vunpack.c.l.b16 %v547
        %v704 = vunpack.c.h.b16 %v547
        %v705 = vunpack.c.l.b16 %v548
        %v706 = vunpack.c.h.b16 %v548
        %v707 = vunpack.c.l.b16 %v549
        %v708 = vunpack.c.h.b16 %v549
        %v709 = vunpack.c.l.b16 %v550
        %v710 = vunpack.c.h.b16 %v550
        %v711 = vunpack.c.l.b16 %v551
        %v712 = vunpack.c.h.b16 %v551
        %v713 = vunpack.c.l.b16 %v552
        %v714 = vunpack.c.h.b16 %v552
        %v715 = vunpack.c.l.b16 %v553
        %v716 = vunpack.c.h.b16 %v553
        %v717 = vunpack.c.l.b16 %v554
        %v718 = vunpack.c.h.b16 %v554
        %v719 = vunpack.c.l.b16 %v555
        %v720 = vunpack.c.h.b16 %v555
        %v721 = vunpack.c.l.b16 %v556
        %v722 = vunpack.c.h.b16 %v556
        %v723 = vunpack.c.l.b16 %v557
        %v724 = vunpack.c.h.b16 %v557
        %v725 = vunpack.c.l.b16 %v558
        %v726 = vunpack.c.h.b16 %v558
        %v727 = vunpack.c.l.b16 %v559
        %v728 = vunpack.c.h.b16 %v559
        %v729 = vunpack.c.l.b16 %v560
        %v730 = vunpack.c.h.b16 %v560
        %v731 = vunpack.c.l.b16 %v561
        %v732 = vunpack.c.h.b16 %v561
        %v733 = vunpack.c.l.b16 %v562
        %v734 = vunpack.c.h.b16 %v562
        %v735 = vunpack.c.l.b16 %v563
        %v736 = vunpack.c.h.b16 %v563
        %v737 = vunpack.c.l.b16 %v564
        %v738 = vunpack.c.h.b16 %v564
        %v739 = vunpack.c.l.b16 %v565
        %v740 = vunpack.c.h.b16 %v565
        %v741 = vunpack.c.l.b16 %v566
        %v742 = vunpack.c.h.b16 %v566
        %v743 = vunpack.c.l.b16 %v567
        %v744 = vunpack.c.h.b16 %v567
        %v745 = vunpack.c.l.b16 %v568
        %v746 = vunpack.c.h.b16 %v568
        %v747 = vunpack.c.l.b16 %v569
        %v748 = vunpack.c.h.b16 %v569
        %v749 = vunpack.c.l.b16 %v570
        %v750 = vunpack.c.h.b16 %v570
        %v751 = vunpack.c.l.b16 %v571
        %v752 = vunpack.c.h.b16 %v571
        %v753 = vunpack.c.l.b16 %v572
        %v754 = vunpack.c.h.b16 %v572
        %v755 = vunpack.c.l.b16 %v573
        %v756 = vunpack.c.h.b16 %v573
        %v757 = vunpack.c.l.b16 %v574
        %v758 = vunpack.c.h.b16 %v574
        %v759 = vunpack.c.l.b16 %v575
        %v760 = vunpack.c.h.b16 %v575
        %v761 = vunpack.c.l.b16 %v576
        %v762 = vunpack.c.h.b16 %v576
        %v763 = vunpack.c.l.b16 %v577
        %v764 = vunpack.c.h.b16 %v577
        %v765 = vunpack.c.l.b16 %v578
        %v766 = vunpack.c.h.b16 %v578
        %v767 = vpack.c.b16 %v673, %v671
        %v768 = vpack.c.b16 %v674, %v672
        %v769 = vpack.c.b16 %v677, %v675
        %v770 = vpack.c.b16 %v678, %v676
        %v771 = vpack.c.b16 %v681, %v679
        %v772 = vpack.c.b16 %v682, %v680
        %v773 = vpack.c.b16 %v685, %v683
        %v774 = vpack.c.b16 %v686, %v684
        %v775 = vpack.c.b16 %v689, %v687
        %v776 = vpack.c.b16 %v690, %v688
        %v777 = vpack.c.b16 %v693, %v691
        %v778 = vpack.c.b16 %v694, %v692
        %v779 = vpack.c.b16 %v697, %v695
        %v780 = vpack.c.b16 %v698, %v696
        %v781 = vpack.c.b16 %v701, %v699
        %v782 = vpack.c.b16 %v702, %v700
        %v783 = vpack.c.b16 %v705, %v703
        %v784 = vpack.c.b16 %v706, %v704
        %v785 = vpack.c.b16 %v709, %v707
        %v786 = vpack.c.b16 %v710, %v708
        %v787 = vpack.c.b16 %v713, %v711
        %v788 = vpack.c.b16 %v714, %v712
        %v789 = vpack.c.b16 %v717, %v715
        %v790 = vpack.c.b16 %v718, %v716
        %v791 = vpack.c.b16 %v721, %v719
        %v792 = vpack.c.b16 %v722, %v720
        %v793 = vpack.c.b16 %v725, %v723
        %v794 = vpack.c.b16 %v726, %v724
        %v795 = vpack.c.b16 %v729, %v727
        %v796 = vpack.c.b16 %v730, %v728
        %v797 = vpack.c.b16 %v733, %v731
        %v798 = vpack.c.b16 %v734, %v732
        %v799 = vpack.c.b16 %v737, %v735
        %v800 = vpack.c.b16 %v738, %v736
        %v801 = vpack.c.b16 %v741, %v739
        %v802 = vpack.c.b16 %v742, %v740
        %v803 = vpack.c.b16 %v745, %v743
        %v804 = vpack.c.b16 %v746, %v744
        %v805 = vpack.c.b16 %v749, %v747
        %v806 = vpack.c.b16 %v750, %v748
        %v807 = vpack.c.b16 %v753, %v751
        %v808 = vpack.c.b16 %v754, %v752
        %v809 = vpack.c.b16 %v757, %v755
        %v810 = vpack.c.b16 %v758, %v756
        %v811 = vpack.c.b16 %v761, %v759
        %v812 = vpack.c.b16 %v762, %v760
        %v813 = vpack.c.b16 %v765, %v763
        %v814 = vpack.c.b16 %v766, %v764
        %863 = vmatprep.subr.bf16.mxu0 %v782
        %864 = vmatpush1.bf16.msra.mxu0 %v781
        %865 = vmatprep.subr.bf16.mxu0 %v780
        %866 = vmatpush1.bf16.msra.mxu0 %v779
        %867 = vmatprep.subr.bf16.mxu0 %v778
        %868 = vmatpush1.bf16.msra.mxu0 %v777
        %869 = vmatprep.subr.bf16.mxu0 %v776
        %870 = vmatpush1.bf16.msra.mxu0 %v775
        %871 = vmatprep.subr.bf16.mxu0 %v774
        %872 = vmatpush1.bf16.msra.mxu0 %v773
        %873 = vmatprep.subr.bf16.mxu0 %v772
        %874 = vmatpush1.bf16.msra.mxu0 %v771
        %875 = vmatprep.subr.bf16.mxu0 %v770
        %876 = vmatpush1.bf16.msra.mxu0 %v769
        %877 = vmatprep.subr.bf16.mxu0 %v768
        %878 = vmatpush1.bf16.msra.mxu0 %v767
        %879 = vmatprep.subr.bf16.mxu0 %v798
        %880 = vmatpush2.bf16.msra.mxu0 %v797
        %881 = vmatprep.subr.bf16.mxu0 %v796
        %882 = vmatpush2.bf16.msra.mxu0 %v795
        %883 = vmatprep.subr.bf16.mxu0 %v794
        %884 = vmatpush2.bf16.msra.mxu0 %v793
        %885 = vmatprep.subr.bf16.mxu0 %v792
        %886 = vmatpush2.bf16.msra.mxu0 %v791
        %887 = vmatprep.subr.bf16.mxu0 %v790
        %888 = vmatpush2.bf16.msra.mxu0 %v789
        %889 = vmatprep.subr.bf16.mxu0 %v788
        %890 = vmatpush2.bf16.msra.mxu0 %v787
        %891 = vmatprep.subr.bf16.mxu0 %v786
        %892 = vmatpush2.bf16.msra.mxu0 %v785
        %893 = vmatprep.subr.bf16.mxu0 %v784
        %894 = vmatpush2.bf16.msra.mxu0 %v783
        %895 = vmatprep.mubr.bf16.mxu0 %v612
        %896 = vmatmul.mubr.bf16.gmra.mxu0 %v611
        %v897 = vpop.f32.mrf.mxu0
        %v898 = vadd.f32 %v584, %v897
        %v899 = vpop.f32.mrf.mxu0
        %v900 = vadd.f32 %v588, %v899
        %v901 = vpop.f32.mrf.mxu0
        %v902 = vadd.f32 %v584, %v901
        %v903 = vpop.f32.mrf.mxu0
        %v904 = vadd.f32 %v588, %v903
        %905 = vmatprep.mubr.bf16.mxu0 %v615
        %906 = vmatmul.mubr.bf16.gmra.mxu0 %v614
        %v907 = vpop.f32.mrf.mxu0
        %v908 = vadd.f32 %v584, %v907
        %v909 = vpop.f32.mrf.mxu0
        %v910 = vadd.f32 %v588, %v909
        %v911 = vpop.f32.mrf.mxu0
        %v912 = vadd.f32 %v584, %v911
        %v913 = vpop.f32.mrf.mxu0
        %v914 = vadd.f32 %v588, %v913
        %915 = vdwg.mxu0
        %916 = vmatprep.subr.bf16.mxu0 %v814
        %917 = vmatpush1.bf16.msra.mxu0 %v813
        %918 = vmatprep.subr.bf16.mxu0 %v812
        %919 = vmatpush1.bf16.msra.mxu0 %v811
        %920 = vmatprep.subr.bf16.mxu0 %v810
        %921 = vmatpush1.bf16.msra.mxu0 %v809
        %922 = vmatprep.subr.bf16.mxu0 %v808
        %923 = vmatpush1.bf16.msra.mxu0 %v807
        %924 = vmatprep.subr.bf16.mxu0 %v806
        %925 = vmatpush1.bf16.msra.mxu0 %v805
        %926 = vmatprep.subr.bf16.mxu0 %v804
        %927 = vmatpush1.bf16.msra.mxu0 %v803
        %928 = vmatprep.subr.bf16.mxu0 %v802
        %929 = vmatpush1.bf16.msra.mxu0 %v801
        %930 = vmatprep.subr.bf16.mxu0 %v800
        %931 = vmatpush1.bf16.msra.mxu0 %v799
        %932 = vmatprep.subr.bf16.mxu0 0
        %933 = vmatpush2.bf16.msra.mxu0 0
        %934 = vmatprep.subr.bf16.mxu0 0
        %935 = vmatpush2.bf16.msra.mxu0 0
        %936 = vmatprep.subr.bf16.mxu0 0
        %937 = vmatpush2.bf16.msra.mxu0 0
        %938 = vmatprep.subr.bf16.mxu0 0
        %939 = vmatpush2.bf16.msra.mxu0 0
        %940 = vmatprep.subr.bf16.mxu0 0
        %941 = vmatpush2.bf16.msra.mxu0 0
        %942 = vmatprep.subr.bf16.mxu0 0
        %943 = vmatpush2.bf16.msra.mxu0 0
        %944 = vmatprep.subr.bf16.mxu0 0
        %945 = vmatpush2.bf16.msra.mxu0 0
        %946 = vmatprep.subr.bf16.mxu0 0
        %947 = vmatpush2.bf16.msra.mxu0 0
        %948 = vmatprep.mubr.bf16.mxu0 0
        %949 = vmatmul.mubr.bf16.gmra.mxu0 %v613
        %v950 = vpop.f32.mrf.mxu0
        %v951 = vadd.f32 %v898, %v950
        %v952 = vpop.f32.mrf.mxu0
        %v953 = vadd.f32 %v900, %v952
        %v954 = vpop.f32.mrf.mxu0
        %v955 = vadd.f32 %v902, %v954
        %v956 = vpop.f32.mrf.mxu0
        %v957 = vadd.f32 %v904, %v956
        %958 = vmatprep.mubr.bf16.mxu0 0
        %959 = vmatmul.mubr.bf16.gmra.mxu0 %v616
        %v960 = vpop.f32.mrf.mxu0
        %v961 = vadd.f32 %v908, %v960
        %v962 = vpop.f32.mrf.mxu0
        %v963 = vadd.f32 %v910, %v962
        %v964 = vpop.f32.mrf.mxu0
        %v965 = vadd.f32 %v912, %v964
        %v966 = vpop.f32.mrf.mxu0
        %v967 = vadd.f32 %v914, %v966
        %968 = vdwg.mxu0
        %v969 = vmul.f32 %v951, 0.5
        %v970 = vmul.f32 %v953, 0.5
        %v971 = vmul.f32 %v955, 0.5
        %v972 = vmul.f32 %v957, 0.5
        %v973 = vmul.f32 %v961, 0.5
        %v974 = vmul.f32 %v963, 0.5
        %v975 = vmul.f32 %v965, 0.5
        %v976 = vmul.f32 %v967, 0.5
        %v977 = vtanh.pop %v969
        %v978 = vtanh.pop %v970
        %v979 = vtanh.pop %v971
        %v980 = vtanh.pop %v972
        %v981 = vtanh.pop %v973
        %v982 = vtanh.pop %v974
        %v983 = vtanh.pop %v975
        %v984 = vtanh.pop %v976
        %v985 = vmul.f32 %v977, 0.5
        %v986 = vmul.f32 %v978, 0.5
        %v987 = vmul.f32 %v979, 0.5
        %v988 = vmul.f32 %v980, 0.5
        %v989 = vmul.f32 %v981, 0.5
        %v990 = vmul.f32 %v982, 0.5
        %v991 = vmul.f32 %v983, 0.5
        %v992 = vmul.f32 %v984, 0.5
        %v993 = vadd.f32 %v985, 0.5
        %v994 = vadd.f32 %v986, 0.5
        %v995 = vadd.f32 %v987, 0.5
        %v996 = vadd.f32 %v988, 0.5
        %v997 = vadd.f32 %v989, 0.5
        %v998 = vadd.f32 %v990, 0.5
        %v999 = vadd.f32 %v991, 0.5
        %v1000 = vadd.f32 %v992, 0.5
        %1001 = vst [vmem:[%s282] sm:$0xff] %v993
        %1002 = vst [vmem:[%s282 + $0x8] sm:$0xff] %v994
        %1003 = vst [vmem:[%s282 + $0x10] sm:$0xff] %v995
        %1004 = vst [vmem:[%s282 + $0x18] sm:$0xff] %v996
        %1005 = vst [vmem:[%s282 + $0x20] sm:$0xff] %v997
        %1006 = vst [vmem:[%s282 + $0x28] sm:$0xff] %v998
        %1007 = vst [vmem:[%s282 + $0x30] sm:$0xff] %v999
        %1008 = vst [vmem:[%s282 + $0x38] sm:$0xff] %v1000
        %s1009 = sand.u32 %s161, 1
        %s1010 = sand.u32 %s161, 1
        %s1011 = smul.addr %s1010, 64
        %s1012 = scalar_lea.vmem [#allocation5], %s1011
        // Predicated region
        $region49: #{bernoulli_decoder_forward.1} parent=39 // pred_check
          %p1013 = pneg %p171
        $region50: #{bernoulli_decoder_forward.1} parent=39 // pred_check_branch
          %1015 = sbr.rel (%p1013) target = $region52
        $region51: #{bernoulli_decoder_forward.1} parent=39 // pred_region
          %s1016 = smul.u32 4, %s23
          %s1017 = smul.u32 2, %s24
          %s1018 = smul.addr %s1016, 8
          %s1019 = sadd.s32 %s1017, %s1018
          %s1020 = smul.addr %s1019, 8
          %s1021 = scalar_lea.vmem %s5, %s1020
          // Predicated region
          $region53: #{bernoulli_decoder_forward.1} parent=51 // pred_check
            _
          $region54: #{bernoulli_decoder_forward.1} parent=51 // pred_check_branch
            %1023 = sbr.rel (0) target = $region56
          $region55: #{bernoulli_decoder_forward.1} parent=51 // pred_region
            // Predicated region
            $region57: #{bernoulli_decoder_forward.1} parent=55 // pred_check
              _
            $region58: #{bernoulli_decoder_forward.1} parent=55 // pred_check_branch
              %1025 = sbr.rel (0) target = $region60
            $region59: #{bernoulli_decoder_forward.1} parent=55 // pred_region
              loop: start=0, step=1, limit=1
              $region61: #{bernoulli_decoder_forward.1} parent=59 // loop_pre_header
                _
              $region62: #{bernoulli_decoder_forward.1} parent=59 // loop_header
                %s1027 = sphi 0, %s1031
                %p1028 = scmp.ge.s32.totalorder %s1027, 1
                %s1032 = sphi %s1012, %s1012
                %s1033 = sphi %s1021, %s1021
              $region63: #{bernoulli_decoder_forward.1} parent=59 // loop_header_branch
                %1030 = sbr.rel (%p1028) target = $region67
              $region64: #{bernoulli_decoder_forward.1} parent=59 // loop_body
                %v1034 = vld [vmem:[%s1032] sm:$0xff]
                %1035 = vst [vmem:[%s1033] sm:$0xff] %v1034
                %v1036 = vld [vmem:[%s1032 + $0x8] sm:$0xff]
                %1037 = vst [vmem:[%s1033 + $0x8] sm:$0xff] %v1036
                %v1038 = vld [vmem:[%s1032 + $0x10] sm:$0xff]
                %1039 = vst [vmem:[%s1033 + $0x40] sm:$0xff] %v1038
                %v1040 = vld [vmem:[%s1032 + $0x18] sm:$0xff]
                %1041 = vst [vmem:[%s1033 + $0x48] sm:$0xff] %v1040
                %v1042 = vld [vmem:[%s1032 + $0x20] sm:$0xff]
                %1043 = vst [vmem:[%s1033 + $0x80] sm:$0xff] %v1042
                %v1044 = vld [vmem:[%s1032 + $0x28] sm:$0xff]
                %1045 = vst [vmem:[%s1033 + $0x88] sm:$0xff] %v1044
                %v1046 = vld [vmem:[%s1032 + $0x30] sm:$0xff]
                %1047 = vst [vmem:[%s1033 + $0xc0] sm:$0xff] %v1046
                %v1048 = vld [vmem:[%s1032 + $0x38] sm:$0xff]
                %1049 = vst [vmem:[%s1033 + $0xc8] sm:$0xff] %v1048
              $region65: #{bernoulli_decoder_forward.1} parent=59 // loop_footer
                %s1031 = sadd.s32 1, %s1027
              $region66: #{bernoulli_decoder_forward.1} parent=59 // loop_footer_branch
                %1026 = sbr.rel target = $region62
              $region67: #{bernoulli_decoder_forward.1} parent=59 // loop_exit
                _
            $region60: #{bernoulli_decoder_forward.1} parent=55 // pred_fallthru
              _
            // Predicated region
            $region68: #{bernoulli_decoder_forward.1} parent=55 // pred_check
              _
            $region69: #{bernoulli_decoder_forward.1} parent=55 // pred_check_branch
              %1051 = sbr.rel target = $region71
            $region70: #{bernoulli_decoder_forward.1} parent=55 // pred_region
              _
            $region71: #{bernoulli_decoder_forward.1} parent=55 // pred_fallthru
              _
          $region56: #{bernoulli_decoder_forward.1} parent=51 // pred_fallthru
            _
          %1052 = vnop
        $region52: #{bernoulli_decoder_forward.1} parent=39 // pred_fallthru
          _
      $region40: #{bernoulli_decoder_forward.1} parent=5 // pred_fallthru
        _
      %p1053 = scmp.le.s32.totalorder 2, %s14
      // Predicated region
      $region72: #{bernoulli_decoder_forward.1} parent=5 // pred_check
        %p1054 = pneg %p1053
      $region73: #{bernoulli_decoder_forward.1} parent=5 // pred_check_branch
        %1056 = sbr.rel (%p1054) target = $region75
      $region74: #{bernoulli_decoder_forward.1} parent=5 // pred_region
        %s1057 = ssub.s32 %s14, 2
        // Predicated region
        $region76: #{bernoulli_decoder_forward.1} parent=74 // pred_check
          %p1058 = pneg %p177
        $region77: #{bernoulli_decoder_forward.1} parent=74 // pred_check_branch
          %1060 = sbr.rel (%p1058) target = $region79
        $region78: #{bernoulli_decoder_forward.1} parent=74 // pred_region
          %s1061 = sand.u32 %s162, 1
          %s1062 = sand.u32 %s162, 1
          %s1063 = smul.addr %s1062, 64
          %s1064 = scalar_lea.vmem [#allocation5], %s1063
        $region79: #{bernoulli_decoder_forward.1} parent=74 // pred_fallthru
          _
      $region75: #{bernoulli_decoder_forward.1} parent=5 // pred_fallthru
        _
    $region6: #{bernoulli_decoder_forward.1} parent=1 // loop_footer
      %s18 = sadd.s32 1, %s14
    $region7: #{bernoulli_decoder_forward.1} parent=1 // loop_footer_branch
      %13 = sbr.rel target = $region3
    $region8: #{bernoulli_decoder_forward.1} parent=1 // loop_exit
      _
    %1065 = vsyncpa [#allocation4], 1
    %s1066 = scalar_lea.sflag [#allocation4], 1
    %1067 = vsyncpa %s1066, 1

</llo_original>
